<compile_context>
chip_gen: v5e
topology: v5e:2x2
jax: 0.10.0
libtpu: 0.0.40
codegen_flags: <defaults>
</compile_context>

<pallas_src>
import functools

import jax
import jax.numpy as jnp
from jax.experimental import pallas as pl
from jax.experimental.pallas import tpu as pltpu

# Module hyper-parameters (seq_max_len / vocab_len are free in the original
# script; pick small deterministic values). Embedding dim 768 kept exact.
EMB_DIM = 768
SEQ_MAX_LEN = 16
VOCAB_LEN = 32


def _embedding_kernel(seq_len, ids_ref, tok_hbm_ref, pos_ref, out_ref,
                      buf_ref, sems):
    """One grid step = one sequence of `seq_len` tokens.

    ids_ref:     SMEM (B, S) int32 token ids   (scalar-prefetch arg)
    tok_hbm_ref: HBM  (V, 768) token embedding table (pl.ANY, not copied)
    pos_ref:     VMEM (SEQ_MAX_LEN, 768) positional table (resident)
    out_ref:     VMEM (1, S, 768) output block
    buf_ref:     VMEM (S, 768) gather scratch
    sems:        DMA semaphores, shape (S,)
    """
    b = pl.program_id(0)

    # Issue all row-gather DMAs up front so they overlap in the DMA engine.
    copies = []
    for j in range(seq_len):
        tok = ids_ref[b, j]                       # SMEM scalar read
        cp = pltpu.make_async_copy(
            tok_hbm_ref.at[pl.ds(tok, 1)],        # (1, 768) row in HBM
            buf_ref.at[pl.ds(j, 1)],              # (1, 768) row in VMEM
            sems.at[j],
        )
        cp.start()
        copies.append(cp)
    for cp in copies:
        cp.wait()

    # Positional embedding: pure VPU add of the first `seq_len` rows.
    emb = buf_ref[...] + pos_ref[0:seq_len, :]    # (S, 768) f32
    out_ref[...] = emb[None, :, :].astype(out_ref.dtype)


def embedding_layer(x, token_table, pos_table):
    """x: (B, S) int32 token ids -> (B, S, 768) embeddings."""
    b, s = x.shape
    vocab, d = token_table.shape
    smax, d2 = pos_table.shape
    assert d == d2
    assert s <= smax, "seq_len exceeds positional-embedding table size"

    ids = x.astype(jnp.int32)
    kernel = functools.partial(_embedding_kernel, s)

    out = pl.pallas_call(
        kernel,
        out_shape=jax.ShapeDtypeStruct((b, s, d), token_table.dtype),
        grid_spec=pltpu.PrefetchScalarGridSpec(
            num_scalar_prefetch=1,                 # ids -> SMEM
            grid=(b,),
            in_specs=[
                # Token table stays in HBM; only gathered rows are DMA'd.
                pl.BlockSpec(memory_space=pl.ANY),
                # Positional table is small; keep it resident in VMEM.
                pl.BlockSpec(memory_space=pltpu.MemorySpace.VMEM),
            ],
            out_specs=pl.BlockSpec((1, s, d), lambda i, ids_ref: (i, 0, 0)),
            scratch_shapes=[
                pltpu.VMEM((s, d), token_table.dtype),   # gather buffer
                pltpu.SemaphoreType.DMA((s,)),           # one sem per row DMA
            ],
        ),
        compiler_params=pltpu.CompilerParams(
            dimension_semantics=("parallel",),    # batch rows split across TCs
        ),
    )(ids, token_table, pos_table)
    return out


if __name__ == "__main__":
    key = jax.random.PRNGKey(0)
    k_tok, k_pos, k_x = jax.random.split(key, 3)

    # Deterministic parameter init (nn.Embedding default ~ N(0, 1)).
    token_table = jax.random.normal(k_tok, (VOCAB_LEN, EMB_DIM), jnp.float32)
    pos_table = jax.random.normal(k_pos, (SEQ_MAX_LEN, EMB_DIM), jnp.float32)

    # Small example input: batch=2, seq=8 token ids.
    B, S = 2, 8
    x = jax.random.randint(k_x, (B, S), 0, VOCAB_LEN, dtype=jnp.int32)

    out = embedding_layer(x, token_table, pos_table)
    out = jax.block_until_ready(out)

    # Pure-JAX reference for correctness.
    positions = jnp.broadcast_to(jnp.arange(S)[None, :], (B, S))
    ref = token_table[x] + pos_table[positions]

    assert out.shape == (B, S, EMB_DIM)
    assert out.dtype == jnp.float32
    assert jnp.allclose(out, ref, atol=1e-5, rtol=1e-5)

    print("KERNEL_OK")
</pallas_src>

<mosaic_0001>
module attributes {stable_mosaic.version = 11 : i64} {
  func.func @_embedding_kernel(%arg0: i32, %arg1: memref<2x8xi32, #tpu.memory_space<smem>>, %arg2: memref<32x768xf32, #tpu.memory_space<any>>, %arg3: memref<16x768xf32, #tpu.memory_space<vmem>>, %arg4: memref<1x8x768xf32, #tpu.memory_space<vmem>>, %arg5: memref<8x768xf32, #tpu.memory_space<vmem>>, %arg6: memref<8x!tpu.dma_semaphore, #tpu.memory_space<semaphore_mem>>) attributes {dimension_semantics = [#tpu.dimension_semantics<parallel>], iteration_bounds = array<i64: 2>, scalar_prefetch = 1 : i64, scratch_operands = 2 : i64, tpu.core_type = #tpu.core_type<tc>, window_params = [{}, {pipeline_mode = #tpu.pipeline_mode<synchronous>, transform_indices = @transform_1, window_bounds = array<i64: 16, 768>}, {transform_indices = @transform_2, window_bounds = array<i64: 1, 8, 768>}]} {
    %0 = arith.index_cast %arg0 : i32 to index
    %c0 = arith.constant 0 : index
    %1 = memref.load %arg1[%0, %c0] : memref<2x8xi32, #tpu.memory_space<smem>>
    %c0_i32 = arith.constant 0 : i32
    %c0_i32_0 = arith.constant 0 : i32
    %2 = tpu.memref_slice %arg2[%1, %c0_i32_0] : memref<32x768xf32, #tpu.memory_space<any>> -> memref<1x768xf32, #tpu.memory_space<any>>
    %c0_i32_1 = arith.constant 0 : i32
    %c0_i32_2 = arith.constant 0 : i32
    %3 = tpu.memref_slice %arg5[%c0_i32_1, %c0_i32_2] : memref<8x768xf32, #tpu.memory_space<vmem>> -> memref<1x768xf32, #tpu.memory_space<vmem>>
    %4 = tpu.memref_slice %arg6[%c0_i32] : memref<8x!tpu.dma_semaphore, #tpu.memory_space<semaphore_mem>> -> memref<1x!tpu.dma_semaphore, #tpu.memory_space<semaphore_mem>>
    %5 = tpu.memref_squeeze %4 : memref<1x!tpu.dma_semaphore, #tpu.memory_space<semaphore_mem>> -> memref<!tpu.dma_semaphore, #tpu.memory_space<semaphore_mem>>
    tpu.enqueue_dma source(%2 : memref<1x768xf32, #tpu.memory_space<any>>) target(%3 : memref<1x768xf32, #tpu.memory_space<vmem>>) target_semaphore(%5 : memref<!tpu.dma_semaphore, #tpu.memory_space<semaphore_mem>>)
    %6 = arith.index_cast %arg0 : i32 to index
    %c1 = arith.constant 1 : index
    %7 = memref.load %arg1[%6, %c1] : memref<2x8xi32, #tpu.memory_space<smem>>
    %c1_i32 = arith.constant 1 : i32
    %c0_i32_3 = arith.constant 0 : i32
    %8 = tpu.memref_slice %arg2[%7, %c0_i32_3] : memref<32x768xf32, #tpu.memory_space<any>> -> memref<1x768xf32, #tpu.memory_space<any>>
    %c1_i32_4 = arith.constant 1 : i32
    %c0_i32_5 = arith.constant 0 : i32
    %9 = tpu.memref_slice %arg5[%c1_i32_4, %c0_i32_5] : memref<8x768xf32, #tpu.memory_space<vmem>> -> memref<1x768xf32, #tpu.memory_space<vmem>>
    %10 = tpu.memref_slice %arg6[%c1_i32] : memref<8x!tpu.dma_semaphore, #tpu.memory_space<semaphore_mem>> -> memref<1x!tpu.dma_semaphore, #tpu.memory_space<semaphore_mem>>
    %11 = tpu.memref_squeeze %10 : memref<1x!tpu.dma_semaphore, #tpu.memory_space<semaphore_mem>> -> memref<!tpu.dma_semaphore, #tpu.memory_space<semaphore_mem>>
    tpu.enqueue_dma source(%8 : memref<1x768xf32, #tpu.memory_space<any>>) target(%9 : memref<1x768xf32, #tpu.memory_space<vmem>>) target_semaphore(%11 : memref<!tpu.dma_semaphore, #tpu.memory_space<semaphore_mem>>)
    %12 = arith.index_cast %arg0 : i32 to index
    %c2 = arith.constant 2 : index
    %13 = memref.load %arg1[%12, %c2] : memref<2x8xi32, #tpu.memory_space<smem>>
    %c2_i32 = arith.constant 2 : i32
    %c0_i32_6 = arith.constant 0 : i32
    %14 = tpu.memref_slice %arg2[%13, %c0_i32_6] : memref<32x768xf32, #tpu.memory_space<any>> -> memref<1x768xf32, #tpu.memory_space<any>>
    %c2_i32_7 = arith.constant 2 : i32
    %c0_i32_8 = arith.constant 0 : i32
    %15 = tpu.memref_slice %arg5[%c2_i32_7, %c0_i32_8] : memref<8x768xf32, #tpu.memory_space<vmem>> -> memref<1x768xf32, #tpu.memory_space<vmem>>
    %16 = tpu.memref_slice %arg6[%c2_i32] : memref<8x!tpu.dma_semaphore, #tpu.memory_space<semaphore_mem>> -> memref<1x!tpu.dma_semaphore, #tpu.memory_space<semaphore_mem>>
    %17 = tpu.memref_squeeze %16 : memref<1x!tpu.dma_semaphore, #tpu.memory_space<semaphore_mem>> -> memref<!tpu.dma_semaphore, #tpu.memory_space<semaphore_mem>>
    tpu.enqueue_dma source(%14 : memref<1x768xf32, #tpu.memory_space<any>>) target(%15 : memref<1x768xf32, #tpu.memory_space<vmem>>) target_semaphore(%17 : memref<!tpu.dma_semaphore, #tpu.memory_space<semaphore_mem>>)
    %18 = arith.index_cast %arg0 : i32 to index
    %c3 = arith.constant 3 : index
    %19 = memref.load %arg1[%18, %c3] : memref<2x8xi32, #tpu.memory_space<smem>>
    %c3_i32 = arith.constant 3 : i32
    %c0_i32_9 = arith.constant 0 : i32
    %20 = tpu.memref_slice %arg2[%19, %c0_i32_9] : memref<32x768xf32, #tpu.memory_space<any>> -> memref<1x768xf32, #tpu.memory_space<any>>
    %c3_i32_10 = arith.constant 3 : i32
    %c0_i32_11 = arith.constant 0 : i32
    %21 = tpu.memref_slice %arg5[%c3_i32_10, %c0_i32_11] : memref<8x768xf32, #tpu.memory_space<vmem>> -> memref<1x768xf32, #tpu.memory_space<vmem>>
    %22 = tpu.memref_slice %arg6[%c3_i32] : memref<8x!tpu.dma_semaphore, #tpu.memory_space<semaphore_mem>> -> memref<1x!tpu.dma_semaphore, #tpu.memory_space<semaphore_mem>>
    %23 = tpu.memref_squeeze %22 : memref<1x!tpu.dma_semaphore, #tpu.memory_space<semaphore_mem>> -> memref<!tpu.dma_semaphore, #tpu.memory_space<semaphore_mem>>
    tpu.enqueue_dma source(%20 : memref<1x768xf32, #tpu.memory_space<any>>) target(%21 : memref<1x768xf32, #tpu.memory_space<vmem>>) target_semaphore(%23 : memref<!tpu.dma_semaphore, #tpu.memory_space<semaphore_mem>>)
    %24 = arith.index_cast %arg0 : i32 to index
    %c4 = arith.constant 4 : index
    %25 = memref.load %arg1[%24, %c4] : memref<2x8xi32, #tpu.memory_space<smem>>
    %c4_i32 = arith.constant 4 : i32
    %c0_i32_12 = arith.constant 0 : i32
    %26 = tpu.memref_slice %arg2[%25, %c0_i32_12] : memref<32x768xf32, #tpu.memory_space<any>> -> memref<1x768xf32, #tpu.memory_space<any>>
    %c4_i32_13 = arith.constant 4 : i32
    %c0_i32_14 = arith.constant 0 : i32
    %27 = tpu.memref_slice %arg5[%c4_i32_13, %c0_i32_14] : memref<8x768xf32, #tpu.memory_space<vmem>> -> memref<1x768xf32, #tpu.memory_space<vmem>>
    %28 = tpu.memref_slice %arg6[%c4_i32] : memref<8x!tpu.dma_semaphore, #tpu.memory_space<semaphore_mem>> -> memref<1x!tpu.dma_semaphore, #tpu.memory_space<semaphore_mem>>
    %29 = tpu.memref_squeeze %28 : memref<1x!tpu.dma_semaphore, #tpu.memory_space<semaphore_mem>> -> memref<!tpu.dma_semaphore, #tpu.memory_space<semaphore_mem>>
    tpu.enqueue_dma source(%26 : memref<1x768xf32, #tpu.memory_space<any>>) target(%27 : memref<1x768xf32, #tpu.memory_space<vmem>>) target_semaphore(%29 : memref<!tpu.dma_semaphore, #tpu.memory_space<semaphore_mem>>)
    %30 = arith.index_cast %arg0 : i32 to index
    %c5 = arith.constant 5 : index
    %31 = memref.load %arg1[%30, %c5] : memref<2x8xi32, #tpu.memory_space<smem>>
    %c5_i32 = arith.constant 5 : i32
    %c0_i32_15 = arith.constant 0 : i32
    %32 = tpu.memref_slice %arg2[%31, %c0_i32_15] : memref<32x768xf32, #tpu.memory_space<any>> -> memref<1x768xf32, #tpu.memory_space<any>>
    %c5_i32_16 = arith.constant 5 : i32
    %c0_i32_17 = arith.constant 0 : i32
    %33 = tpu.memref_slice %arg5[%c5_i32_16, %c0_i32_17] : memref<8x768xf32, #tpu.memory_space<vmem>> -> memref<1x768xf32, #tpu.memory_space<vmem>>
    %34 = tpu.memref_slice %arg6[%c5_i32] : memref<8x!tpu.dma_semaphore, #tpu.memory_space<semaphore_mem>> -> memref<1x!tpu.dma_semaphore, #tpu.memory_space<semaphore_mem>>
    %35 = tpu.memref_squeeze %34 : memref<1x!tpu.dma_semaphore, #tpu.memory_space<semaphore_mem>> -> memref<!tpu.dma_semaphore, #tpu.memory_space<semaphore_mem>>
    tpu.enqueue_dma source(%32 : memref<1x768xf32, #tpu.memory_space<any>>) target(%33 : memref<1x768xf32, #tpu.memory_space<vmem>>) target_semaphore(%35 : memref<!tpu.dma_semaphore, #tpu.memory_space<semaphore_mem>>)
    %36 = arith.index_cast %arg0 : i32 to index
    %c6 = arith.constant 6 : index
    %37 = memref.load %arg1[%36, %c6] : memref<2x8xi32, #tpu.memory_space<smem>>
    %c6_i32 = arith.constant 6 : i32
    %c0_i32_18 = arith.constant 0 : i32
    %38 = tpu.memref_slice %arg2[%37, %c0_i32_18] : memref<32x768xf32, #tpu.memory_space<any>> -> memref<1x768xf32, #tpu.memory_space<any>>
    %c6_i32_19 = arith.constant 6 : i32
    %c0_i32_20 = arith.constant 0 : i32
    %39 = tpu.memref_slice %arg5[%c6_i32_19, %c0_i32_20] : memref<8x768xf32, #tpu.memory_space<vmem>> -> memref<1x768xf32, #tpu.memory_space<vmem>>
    %40 = tpu.memref_slice %arg6[%c6_i32] : memref<8x!tpu.dma_semaphore, #tpu.memory_space<semaphore_mem>> -> memref<1x!tpu.dma_semaphore, #tpu.memory_space<semaphore_mem>>
    %41 = tpu.memref_squeeze %40 : memref<1x!tpu.dma_semaphore, #tpu.memory_space<semaphore_mem>> -> memref<!tpu.dma_semaphore, #tpu.memory_space<semaphore_mem>>
    tpu.enqueue_dma source(%38 : memref<1x768xf32, #tpu.memory_space<any>>) target(%39 : memref<1x768xf32, #tpu.memory_space<vmem>>) target_semaphore(%41 : memref<!tpu.dma_semaphore, #tpu.memory_space<semaphore_mem>>)
    %42 = arith.index_cast %arg0 : i32 to index
    %c7 = arith.constant 7 : index
    %43 = memref.load %arg1[%42, %c7] : memref<2x8xi32, #tpu.memory_space<smem>>
    %c7_i32 = arith.constant 7 : i32
    %c0_i32_21 = arith.constant 0 : i32
    %44 = tpu.memref_slice %arg2[%43, %c0_i32_21] : memref<32x768xf32, #tpu.memory_space<any>> -> memref<1x768xf32, #tpu.memory_space<any>>
    %c7_i32_22 = arith.constant 7 : i32
    %c0_i32_23 = arith.constant 0 : i32
    %45 = tpu.memref_slice %arg5[%c7_i32_22, %c0_i32_23] : memref<8x768xf32, #tpu.memory_space<vmem>> -> memref<1x768xf32, #tpu.memory_space<vmem>>
    %46 = tpu.memref_slice %arg6[%c7_i32] : memref<8x!tpu.dma_semaphore, #tpu.memory_space<semaphore_mem>> -> memref<1x!tpu.dma_semaphore, #tpu.memory_space<semaphore_mem>>
    %47 = tpu.memref_squeeze %46 : memref<1x!tpu.dma_semaphore, #tpu.memory_space<semaphore_mem>> -> memref<!tpu.dma_semaphore, #tpu.memory_space<semaphore_mem>>
    tpu.enqueue_dma source(%44 : memref<1x768xf32, #tpu.memory_space<any>>) target(%45 : memref<1x768xf32, #tpu.memory_space<vmem>>) target_semaphore(%47 : memref<!tpu.dma_semaphore, #tpu.memory_space<semaphore_mem>>)
    %c0_i32_24 = arith.constant 0 : i32
    %c0_i32_25 = arith.constant 0 : i32
    %48 = tpu.memref_slice %arg2[%1, %c0_i32_25] : memref<32x768xf32, #tpu.memory_space<any>> -> memref<1x768xf32, #tpu.memory_space<any>>
    %c0_i32_26 = arith.constant 0 : i32
    %c0_i32_27 = arith.constant 0 : i32
    %49 = tpu.memref_slice %arg5[%c0_i32_26, %c0_i32_27] : memref<8x768xf32, #tpu.memory_space<vmem>> -> memref<1x768xf32, #tpu.memory_space<vmem>>
    %50 = tpu.memref_slice %arg6[%c0_i32_24] : memref<8x!tpu.dma_semaphore, #tpu.memory_space<semaphore_mem>> -> memref<1x!tpu.dma_semaphore, #tpu.memory_space<semaphore_mem>>
    %51 = tpu.memref_squeeze %50 : memref<1x!tpu.dma_semaphore, #tpu.memory_space<semaphore_mem>> -> memref<!tpu.dma_semaphore, #tpu.memory_space<semaphore_mem>>
    tpu.wait_dma2 semaphore(%51 : memref<!tpu.dma_semaphore, #tpu.memory_space<semaphore_mem>>) src(%48 : memref<1x768xf32, #tpu.memory_space<any>>) dst(%49 : memref<1x768xf32, #tpu.memory_space<vmem>>)
    %c1_i32_28 = arith.constant 1 : i32
    %c0_i32_29 = arith.constant 0 : i32
    %52 = tpu.memref_slice %arg2[%7, %c0_i32_29] : memref<32x768xf32, #tpu.memory_space<any>> -> memref<1x768xf32, #tpu.memory_space<any>>
    %c1_i32_30 = arith.constant 1 : i32
    %c0_i32_31 = arith.constant 0 : i32
    %53 = tpu.memref_slice %arg5[%c1_i32_30, %c0_i32_31] : memref<8x768xf32, #tpu.memory_space<vmem>> -> memref<1x768xf32, #tpu.memory_space<vmem>>
    %54 = tpu.memref_slice %arg6[%c1_i32_28] : memref<8x!tpu.dma_semaphore, #tpu.memory_space<semaphore_mem>> -> memref<1x!tpu.dma_semaphore, #tpu.memory_space<semaphore_mem>>
    %55 = tpu.memref_squeeze %54 : memref<1x!tpu.dma_semaphore, #tpu.memory_space<semaphore_mem>> -> memref<!tpu.dma_semaphore, #tpu.memory_space<semaphore_mem>>
    tpu.wait_dma2 semaphore(%55 : memref<!tpu.dma_semaphore, #tpu.memory_space<semaphore_mem>>) src(%52 : memref<1x768xf32, #tpu.memory_space<any>>) dst(%53 : memref<1x768xf32, #tpu.memory_space<vmem>>)
    %c2_i32_32 = arith.constant 2 : i32
    %c0_i32_33 = arith.constant 0 : i32
    %56 = tpu.memref_slice %arg2[%13, %c0_i32_33] : memref<32x768xf32, #tpu.memory_space<any>> -> memref<1x768xf32, #tpu.memory_space<any>>
    %c2_i32_34 = arith.constant 2 : i32
    %c0_i32_35 = arith.constant 0 : i32
    %57 = tpu.memref_slice %arg5[%c2_i32_34, %c0_i32_35] : memref<8x768xf32, #tpu.memory_space<vmem>> -> memref<1x768xf32, #tpu.memory_space<vmem>>
    %58 = tpu.memref_slice %arg6[%c2_i32_32] : memref<8x!tpu.dma_semaphore, #tpu.memory_space<semaphore_mem>> -> memref<1x!tpu.dma_semaphore, #tpu.memory_space<semaphore_mem>>
    %59 = tpu.memref_squeeze %58 : memref<1x!tpu.dma_semaphore, #tpu.memory_space<semaphore_mem>> -> memref<!tpu.dma_semaphore, #tpu.memory_space<semaphore_mem>>
    tpu.wait_dma2 semaphore(%59 : memref<!tpu.dma_semaphore, #tpu.memory_space<semaphore_mem>>) src(%56 : memref<1x768xf32, #tpu.memory_space<any>>) dst(%57 : memref<1x768xf32, #tpu.memory_space<vmem>>)
    %c3_i32_36 = arith.constant 3 : i32
    %c0_i32_37 = arith.constant 0 : i32
    %60 = tpu.memref_slice %arg2[%19, %c0_i32_37] : memref<32x768xf32, #tpu.memory_space<any>> -> memref<1x768xf32, #tpu.memory_space<any>>
    %c3_i32_38 = arith.constant 3 : i32
    %c0_i32_39 = arith.constant 0 : i32
    %61 = tpu.memref_slice %arg5[%c3_i32_38, %c0_i32_39] : memref<8x768xf32, #tpu.memory_space<vmem>> -> memref<1x768xf32, #tpu.memory_space<vmem>>
    %62 = tpu.memref_slice %arg6[%c3_i32_36] : memref<8x!tpu.dma_semaphore, #tpu.memory_space<semaphore_mem>> -> memref<1x!tpu.dma_semaphore, #tpu.memory_space<semaphore_mem>>
    %63 = tpu.memref_squeeze %62 : memref<1x!tpu.dma_semaphore, #tpu.memory_space<semaphore_mem>> -> memref<!tpu.dma_semaphore, #tpu.memory_space<semaphore_mem>>
    tpu.wait_dma2 semaphore(%63 : memref<!tpu.dma_semaphore, #tpu.memory_space<semaphore_mem>>) src(%60 : memref<1x768xf32, #tpu.memory_space<any>>) dst(%61 : memref<1x768xf32, #tpu.memory_space<vmem>>)
    %c4_i32_40 = arith.constant 4 : i32
    %c0_i32_41 = arith.constant 0 : i32
    %64 = tpu.memref_slice %arg2[%25, %c0_i32_41] : memref<32x768xf32, #tpu.memory_space<any>> -> memref<1x768xf32, #tpu.memory_space<any>>
    %c4_i32_42 = arith.constant 4 : i32
    %c0_i32_43 = arith.constant 0 : i32
    %65 = tpu.memref_slice %arg5[%c4_i32_42, %c0_i32_43] : memref<8x768xf32, #tpu.memory_space<vmem>> -> memref<1x768xf32, #tpu.memory_space<vmem>>
    %66 = tpu.memref_slice %arg6[%c4_i32_40] : memref<8x!tpu.dma_semaphore, #tpu.memory_space<semaphore_mem>> -> memref<1x!tpu.dma_semaphore, #tpu.memory_space<semaphore_mem>>
    %67 = tpu.memref_squeeze %66 : memref<1x!tpu.dma_semaphore, #tpu.memory_space<semaphore_mem>> -> memref<!tpu.dma_semaphore, #tpu.memory_space<semaphore_mem>>
    tpu.wait_dma2 semaphore(%67 : memref<!tpu.dma_semaphore, #tpu.memory_space<semaphore_mem>>) src(%64 : memref<1x768xf32, #tpu.memory_space<any>>) dst(%65 : memref<1x768xf32, #tpu.memory_space<vmem>>)
    %c5_i32_44 = arith.constant 5 : i32
    %c0_i32_45 = arith.constant 0 : i32
    %68 = tpu.memref_slice %arg2[%31, %c0_i32_45] : memref<32x768xf32, #tpu.memory_space<any>> -> memref<1x768xf32, #tpu.memory_space<any>>
    %c5_i32_46 = arith.constant 5 : i32
    %c0_i32_47 = arith.constant 0 : i32
    %69 = tpu.memref_slice %arg5[%c5_i32_46, %c0_i32_47] : memref<8x768xf32, #tpu.memory_space<vmem>> -> memref<1x768xf32, #tpu.memory_space<vmem>>
    %70 = tpu.memref_slice %arg6[%c5_i32_44] : memref<8x!tpu.dma_semaphore, #tpu.memory_space<semaphore_mem>> -> memref<1x!tpu.dma_semaphore, #tpu.memory_space<semaphore_mem>>
    %71 = tpu.memref_squeeze %70 : memref<1x!tpu.dma_semaphore, #tpu.memory_space<semaphore_mem>> -> memref<!tpu.dma_semaphore, #tpu.memory_space<semaphore_mem>>
    tpu.wait_dma2 semaphore(%71 : memref<!tpu.dma_semaphore, #tpu.memory_space<semaphore_mem>>) src(%68 : memref<1x768xf32, #tpu.memory_space<any>>) dst(%69 : memref<1x768xf32, #tpu.memory_space<vmem>>)
    %c6_i32_48 = arith.constant 6 : i32
    %c0_i32_49 = arith.constant 0 : i32
    %72 = tpu.memref_slice %arg2[%37, %c0_i32_49] : memref<32x768xf32, #tpu.memory_space<any>> -> memref<1x768xf32, #tpu.memory_space<any>>
    %c6_i32_50 = arith.constant 6 : i32
    %c0_i32_51 = arith.constant 0 : i32
    %73 = tpu.memref_slice %arg5[%c6_i32_50, %c0_i32_51] : memref<8x768xf32, #tpu.memory_space<vmem>> -> memref<1x768xf32, #tpu.memory_space<vmem>>
    %74 = tpu.memref_slice %arg6[%c6_i32_48] : memref<8x!tpu.dma_semaphore, #tpu.memory_space<semaphore_mem>> -> memref<1x!tpu.dma_semaphore, #tpu.memory_space<semaphore_mem>>
    %75 = tpu.memref_squeeze %74 : memref<1x!tpu.dma_semaphore, #tpu.memory_space<semaphore_mem>> -> memref<!tpu.dma_semaphore, #tpu.memory_space<semaphore_mem>>
    tpu.wait_dma2 semaphore(%75 : memref<!tpu.dma_semaphore, #tpu.memory_space<semaphore_mem>>) src(%72 : memref<1x768xf32, #tpu.memory_space<any>>) dst(%73 : memref<1x768xf32, #tpu.memory_space<vmem>>)
    %c7_i32_52 = arith.constant 7 : i32
    %c0_i32_53 = arith.constant 0 : i32
    %76 = tpu.memref_slice %arg2[%43, %c0_i32_53] : memref<32x768xf32, #tpu.memory_space<any>> -> memref<1x768xf32, #tpu.memory_space<any>>
    %c7_i32_54 = arith.constant 7 : i32
    %c0_i32_55 = arith.constant 0 : i32
    %77 = tpu.memref_slice %arg5[%c7_i32_54, %c0_i32_55] : memref<8x768xf32, #tpu.memory_space<vmem>> -> memref<1x768xf32, #tpu.memory_space<vmem>>
    %78 = tpu.memref_slice %arg6[%c7_i32_52] : memref<8x!tpu.dma_semaphore, #tpu.memory_space<semaphore_mem>> -> memref<1x!tpu.dma_semaphore, #tpu.memory_space<semaphore_mem>>
    %79 = tpu.memref_squeeze %78 : memref<1x!tpu.dma_semaphore, #tpu.memory_space<semaphore_mem>> -> memref<!tpu.dma_semaphore, #tpu.memory_space<semaphore_mem>>
    tpu.wait_dma2 semaphore(%79 : memref<!tpu.dma_semaphore, #tpu.memory_space<semaphore_mem>>) src(%76 : memref<1x768xf32, #tpu.memory_space<any>>) dst(%77 : memref<1x768xf32, #tpu.memory_space<vmem>>)
    %c0_56 = arith.constant 0 : index
    %c0_57 = arith.constant 0 : index
    %80 = vector.load %arg5[%c0_56, %c0_57] : memref<8x768xf32, #tpu.memory_space<vmem>>, vector<8x768xf32>
    %c0_58 = arith.constant 0 : index
    %c0_59 = arith.constant 0 : index
    %81 = vector.load %arg3[%c0_58, %c0_59] : memref<16x768xf32, #tpu.memory_space<vmem>>, vector<8x768xf32>
    %82 = arith.addf %80, %81 : vector<8x768xf32>
    %83 = vector.shape_cast %82 : vector<8x768xf32> to vector<1x8x768xf32>
    %c0_60 = arith.constant 0 : index
    %c0_61 = arith.constant 0 : index
    %c0_62 = arith.constant 0 : index
    %84 = vector.load %arg4[%c0_60, %c0_61, %c0_62] : memref<1x8x768xf32, #tpu.memory_space<vmem>>, vector<1x8x768xf32>
    tpu.vector_store %arg4[%c0_60, %c0_61, %c0_62], %83 {strides = array<i32>} : memref<1x8x768xf32, #tpu.memory_space<vmem>>, vector<1x8x768xf32>,
    return
  }
  func.func @transform_1(%arg0: i32, %arg1: memref<2x8xi32, #tpu.memory_space<smem>>) -> (i32, i32) {
    %c0_i32 = arith.constant 0 : i32
    %c0_i32_0 = arith.constant 0 : i32
    %c0_i32_1 = arith.constant 0 : i32
    return %c0_i32, %c0_i32_0 : i32, i32
  }
  func.func @transform_2(%arg0: i32, %arg1: memref<2x8xi32, #tpu.memory_space<smem>>) -> (i32, i32, i32) {
    %c0_i32 = arith.constant 0 : i32
    %c0_i32_0 = arith.constant 0 : i32
    %c0_i32_1 = arith.constant 0 : i32
    return %arg0, %c0_i32, %c0_i32_0 : i32, i32, i32
  }
}

</mosaic_0001>

<llo_original>
// kernel: tpu_custom_call.1
$region0: #{tpu_custom_call.1}
  #allocation0 [shape = 'u32[]', space=smem, size = 0x4, offset = 0x4, fixed_abs, tag = 'smem constant byte address 0x4 - core index']
  #allocation1 [shape = 'u32[72,128]{1,0:T(1,128)}', space=vmem, size = 0x9000, scoped, tag = 'internal scratch']
  #allocation2 [shape = 'f32[8,768]{1,0:T(8,128)}', space=vmem, size = 0x6000, scoped, tag = 'scratch operand']
  #allocation3 [shape = 's32[8]{0}', space=sflag, size = 0x20, scoped, tag = 'scratch operand']
  #allocation4 [shape = 's32[1]{0}', space=sflag, size = 0x4, scoped, tag = 'scoped memory for tpu_custom_call.1']
  #allocation5 [shape = 'u8[1024]{0}', space=smem, size = 0x400, scoped, tag = 'prefetched SMEM operand 0']
  #allocation10 [shape = 's32[]', space=sflag, size = 0x4, offset = 0, fixed_abs, tag = 'sflag constant byte address 0x0 - dummy sync flag']
  #allocation11 [shape = 's32[]', space=sflag, size = 0x4, offset = 0, fixed_abs, tag = 'sflag constant byte address 0x0 - dummy sync flag']
  #allocation12 [shape = 's32[]', space=sflag, size = 0x4, offset = 0, fixed_abs, tag = 'sflag constant byte address 0x0 - dummy sync flag']
  #allocation13 [shape = 's32[]', space=sflag, size = 0x4, offset = 0, fixed_abs, tag = 'sflag constant byte address 0x0 - dummy sync flag']
  #allocation14 [shape = 's32[]', space=sflag, size = 0x4, offset = 0, fixed_abs, tag = 'sflag constant byte address 0x0 - dummy sync flag']
  #allocation15 [shape = 's32[]', space=sflag, size = 0x4, offset = 0, fixed_abs, tag = 'sflag constant byte address 0x0 - dummy sync flag']
  #allocation16 [shape = 's32[]', space=sflag, size = 0x4, offset = 0, fixed_abs, tag = 'sflag constant byte address 0x0 - dummy sync flag']
  #allocation17 [shape = 's32[]', space=sflag, size = 0x4, offset = 0, fixed_abs, tag = 'sflag constant byte address 0x0 - dummy sync flag']
  %s0 = inlined_call_operand.hbm [shape: s32[2,8], index: 0, kind: input, shape index: {}]
  %s1 = inlined_call_operand.hbm [shape: f32[32,768], index: 1, kind: input, shape index: {}]
  %s2 = inlined_call_operand.hbm [shape: f32[16,768], index: 2, kind: input, shape index: {}]
  %s3 = inlined_call_operand.hbm [shape: f32[2,8,768], index: 3, kind: output, shape index: {}]
  %s4 = sld [smem:[#allocation0]]
  $region41: #{tpu_custom_call.1} parent=0
    _
  %s6 = ssub.s32 1, %s4
  %s7 = scalar_select 0, %s6, %s4
  %s9 = sshll.u32 %s0, 4
  %s10 = int_to_ptr.hbm [resolvable:$true] %s9
  %12 = dma.hbm_to_smem %s10, 32, [#allocation5], [#allocation4]
  %14 = dma.done [#allocation4], 32
  %15 = sfence
  $region1: #{tpu_custom_call.1} parent=0
    #allocation6 [shape = 'u8[49152]{0}', space=vmem, size = 0xc000, scoped, tag = 'input window, operand 2, single buffered']
    #allocation7 [shape = 's32[2]{0}', space=sflag, size = 0x8, scoped, tag = 'scoped memory for tpu_custom_call.1']
    #allocation8 [shape = 's32[2]{0}', space=sflag, size = 0x8, scoped, tag = 'scoped memory for tpu_custom_call.1']
    #allocation9 [shape = 'u8[49152]{0}', space=vmem, size = 0xc000, scoped, tag = 'output window, operand 0']
    %16 = vsyncpa [#allocation7], 0
    %17 = vsyncpa [#allocation8], 0
    %s18 = scalar_lea.sflag [#allocation8], 1
    %19 = vsyncpa %s18, 0
    loop: start=0, step=1, limit=4
    $region2: #{tpu_custom_call.1} parent=1 // loop_pre_header
      _
    $region3: #{tpu_custom_call.1} parent=1 // loop_header
      %s21 = sphi 0, %s25
      %p22 = scmp.ge.s32.totalorder %s21, 4
      %s29 = sphi 0, %s29
      %s31 = sphi 0, %s29
      %s32 = sphi 0, %s31
      %s46 = sphi 0, %s32
      %s52 = sphi 0, %s54
      %s55 = sphi 0, %s52
      %s56 = sphi 0, %s55
      %s72 = sphi 0, %s56
    $region4: #{tpu_custom_call.1} parent=1 // loop_header_branch
      %24 = sbr.rel (%p22) target = $region8
    $region5: #{tpu_custom_call.1} parent=1 // loop_body
      %s26 = ssub.s32 %s21, 1
      %s27 = ssub.s32 %s21, 2
      %s28 = sadd.s32 %s21, 1
      %s30 = sadd.s32 %s29, 1
      %p33 = scmp.eq.s32.totalorder %s21, 1
      %p34 = scmp.ne.s32.totalorder %s29, %s31
      %p35 = scmp.eq.s32.totalorder %s21, 0
      %p36 = por %p34, %p35
      %p37 = scmp.ne.s32.totalorder %s29, %s31
      %p38 = scmp.eq.s32.totalorder %s26, 1
      %p39 = por %p37, %p38
      %p40 = scmp.ne.s32.totalorder %s31, %s32
      %p41 = scmp.eq.s32.totalorder %s26, 0
      %p42 = por %p40, %p41
      %p43 = scmp.ne.s32.totalorder %s31, %s32
      %p44 = scmp.eq.s32.totalorder %s27, 1
      %p45 = por %p43, %p44
      %p47 = scmp.ne.s32.totalorder %s32, %s46
      %p48 = scmp.eq.s32.totalorder %s27, 0
      %p49 = por %p47, %p48
      %s50 = ssub.s32 %s21, %s28
      %p51 = scmp.eq.s32.totalorder %s50, 0
      %s53 = sadd.s32 %s52, 1
      %s54 = scalar_select %p51, %s52, %s53
      %p57 = pneg %p51
      %p58 = scmp.eq.s32.totalorder %s21, 1
      %p59 = por %p57, %p58
      %p60 = scmp.ne.s32.totalorder %s52, %s55
      %p61 = scmp.eq.s32.totalorder %s21, 0
      %p62 = por %p60, %p61
      %p63 = scmp.ne.s32.totalorder %s52, %s55
      %p64 = scmp.eq.s32.totalorder %s26, 1
      %p65 = por %p63, %p64
      %p66 = scmp.ne.s32.totalorder %s55, %s56
      %p67 = scmp.eq.s32.totalorder %s26, 0
      %p68 = por %p66, %p67
      %p69 = scmp.ne.s32.totalorder %s55, %s56
      %p70 = scmp.eq.s32.totalorder %s27, 1
      %p71 = por %p69, %p70
      %p73 = scmp.ne.s32.totalorder %s56, %s72
      %p74 = scmp.eq.s32.totalorder %s27, 0
      %p75 = por %p73, %p74
      %p76 = scmp.le.s32.totalorder 1, %s21
      %p77 = scmp.lt.s32.totalorder %s21, 3
      %p78 = pnand %p76, %p77
      %p79 = pneg %p78
      // Predicated region
      $region9: #{tpu_custom_call.1} parent=5 // pred_check
        _
      $region10: #{tpu_custom_call.1} parent=5 // pred_check_branch
        %81 = sbr.rel (%p78) target = $region12
      $region11: #{tpu_custom_call.1} parent=5 // pred_region
        %s82 = ssub.s32 %s21, 1
        // Predicated region
        $region13: #{tpu_custom_call.1} parent=11 // pred_check
          %p83 = pneg %p42
        $region14: #{tpu_custom_call.1} parent=11 // pred_check_branch
          %85 = sbr.rel (%p83) target = $region16
        $region15: #{tpu_custom_call.1} parent=11 // pred_region
          %87 = vsyncadd [#allocation7], 0
          %s88 = sshll.u32 %s2, 4
          %s89 = int_to_ptr.hbm [resolvable:$true] %s88
          %s90 = sshll.u32 [#allocation6], 4
          %s91 = int_to_ptr.vmem [resolvable:$true] %s90
          %96 = dma.hbm_to_vmem [thread:$0]  %s89, 1536, %s91, [#allocation7], 768, 768, 48
        $region16: #{tpu_custom_call.1} parent=11 // pred_fallthru
          _
      $region12: #{tpu_custom_call.1} parent=5 // pred_fallthru
        _
      %p97 = scmp.lt.s32.totalorder %s21, 2
      // Predicated region
      $region17: #{tpu_custom_call.1} parent=5 // pred_check
        %p98 = pneg %p97
      $region18: #{tpu_custom_call.1} parent=5 // pred_check_branch
        %100 = sbr.rel (%p98) target = $region20
      $region19: #{tpu_custom_call.1} parent=5 // pred_region
        _
      $region20: #{tpu_custom_call.1} parent=5 // pred_fallthru
        _
      %p101 = scmp.le.s32.totalorder 1, %s21
      %p102 = scmp.lt.s32.totalorder %s21, 3
      %p103 = pnand %p101, %p102
      %p104 = pneg %p103
      // Predicated region
      $region21: #{tpu_custom_call.1} parent=5 // pred_check
        _
      $region22: #{tpu_custom_call.1} parent=5 // pred_check_branch
        %106 = sbr.rel (%p103) target = $region24
      $region23: #{tpu_custom_call.1} parent=5 // pred_region
        %s107 = ssub.s32 %s21, 1
        // Predicated region
        $region25: #{tpu_custom_call.1} parent=23 // pred_check
          %p108 = pneg %p42
        $region26: #{tpu_custom_call.1} parent=23 // pred_check_branch
          %110 = sbr.rel (%p108) target = $region28
        $region27: #{tpu_custom_call.1} parent=23 // pred_region
          %112 = dma.done [#allocation7], 1536
        $region28: #{tpu_custom_call.1} parent=23 // pred_fallthru
          _
        %p113 = pneg %p42
        %p114 = pneg %p39
        %p115 = pneg %p68
        %p116 = pneg %p65
        %s117 = sand.u32 %s55, 1
        %s118 = scalar_lea.sflag [#allocation8], %s117
        %s119 = sand.u32 %s55, 1
        %s120 = smul.addr %s119, 48
        %s121 = scalar_lea.vmem [#allocation9], %s120
        %s122 = smul.u32 %s26, 128
        %s123 = sld [smem:[#allocation5 + %s122]]
        %s124 = sshrl.u32 %s123, 3
        %s125 = sand.u32 %s123, 7
        %s126 = smul.u32 %s124, 48
        %s127 = sadd.s32 %s125, %s126
        %s128 = scalar_lea.hbm %s1, %s127
        %s129 = sshll.u32 %s128, 4
        %s130 = int_to_ptr.hbm [resolvable:$true] %s129
        %s131 = sshll.u32 [#allocation2], 4
        %s132 = int_to_ptr.vmem [resolvable:$true] %s131
        %136 = dma.hbm_to_vmem [thread:$0]  %s130, 96, %s132, [#allocation3], 128, 128, 1
        %s137 = sadd.s32 %s122, 1
        %s138 = sld [smem:[#allocation5 + %s137]]
        %s139 = sshrl.u32 %s138, 3
        %s140 = sand.u32 %s138, 7
        %s141 = smul.u32 %s139, 48
        %s142 = sadd.s32 %s140, %s141
        %s143 = scalar_lea.hbm %s1, %s142
        %s144 = scalar_lea.vmem [#allocation2], 1
        %s145 = scalar_lea.sflag [#allocation3], 1
        %s146 = sshll.u32 %s143, 4
        %s147 = int_to_ptr.hbm [resolvable:$true] %s146
        %s148 = sshll.u32 %s144, 4
        %s149 = int_to_ptr.vmem [resolvable:$true] %s148
        %153 = dma.hbm_to_vmem [thread:$0]  %s147, 96, %s149, %s145, 128, 128, 1
        %s154 = sadd.s32 %s122, 2
        %s155 = sld [smem:[#allocation5 + %s154]]
        %s156 = sshrl.u32 %s155, 3
        %s157 = sand.u32 %s155, 7
        %s158 = smul.u32 %s156, 48
        %s159 = sadd.s32 %s157, %s158
        %s160 = scalar_lea.hbm %s1, %s159
        %s161 = scalar_lea.vmem [#allocation2], 2
        %s162 = scalar_lea.sflag [#allocation3], 2
        %s163 = sshll.u32 %s160, 4
        %s164 = int_to_ptr.hbm [resolvable:$true] %s163
        %s165 = sshll.u32 %s161, 4
        %s166 = int_to_ptr.vmem [resolvable:$true] %s165
        %170 = dma.hbm_to_vmem [thread:$0]  %s164, 96, %s166, %s162, 128, 128, 1
        %s171 = sadd.s32 %s122, 3
        %s172 = sld [smem:[#allocation5 + %s171]]
        %s173 = sshrl.u32 %s172, 3
        %s174 = sand.u32 %s172, 7
        %s175 = smul.u32 %s173, 48
        %s176 = sadd.s32 %s174, %s175
        %s177 = scalar_lea.hbm %s1, %s176
        %s178 = scalar_lea.vmem [#allocation2], 3
        %s179 = scalar_lea.sflag [#allocation3], 3
        %s180 = sshll.u32 %s177, 4
        %s181 = int_to_ptr.hbm [resolvable:$true] %s180
        %s182 = sshll.u32 %s178, 4
        %s183 = int_to_ptr.vmem [resolvable:$true] %s182
        %187 = dma.hbm_to_vmem [thread:$0]  %s181, 96, %s183, %s179, 128, 128, 1
        %s188 = sadd.s32 %s122, 4
        %s189 = sld [smem:[#allocation5 + %s188]]
        %s190 = sshrl.u32 %s189, 3
        %s191 = sand.u32 %s189, 7
        %s192 = smul.u32 %s190, 48
        %s193 = sadd.s32 %s191, %s192
        %s194 = scalar_lea.hbm %s1, %s193
        %s195 = scalar_lea.vmem [#allocation2], 4
        %s196 = scalar_lea.sflag [#allocation3], 4
        %s197 = sshll.u32 %s194, 4
        %s198 = int_to_ptr.hbm [resolvable:$true] %s197
        %s199 = sshll.u32 %s195, 4
        %s200 = int_to_ptr.vmem [resolvable:$true] %s199
        %204 = dma.hbm_to_vmem [thread:$0]  %s198, 96, %s200, %s196, 128, 128, 1
        %s205 = sadd.s32 %s122, 5
        %s206 = sld [smem:[#allocation5 + %s205]]
        %s207 = sshrl.u32 %s206, 3
        %s208 = sand.u32 %s206, 7
        %s209 = smul.u32 %s207, 48
        %s210 = sadd.s32 %s208, %s209
        %s211 = scalar_lea.hbm %s1, %s210
        %s212 = scalar_lea.vmem [#allocation2], 5
        %s213 = scalar_lea.sflag [#allocation3], 5
        %s214 = sshll.u32 %s211, 4
        %s215 = int_to_ptr.hbm [resolvable:$true] %s214
        %s216 = sshll.u32 %s212, 4
        %s217 = int_to_ptr.vmem [resolvable:$true] %s216
        %221 = dma.hbm_to_vmem [thread:$0]  %s215, 96, %s217, %s213, 128, 128, 1
        %s222 = sadd.s32 %s122, 6
        %s223 = sld [smem:[#allocation5 + %s222]]
        %s224 = sshrl.u32 %s223, 3
        %s225 = sand.u32 %s223, 7
        %s226 = smul.u32 %s224, 48
        %s227 = sadd.s32 %s225, %s226
        %s228 = scalar_lea.hbm %s1, %s227
        %s229 = scalar_lea.vmem [#allocation2], 6
        %s230 = scalar_lea.sflag [#allocation3], 6
        %s231 = sshll.u32 %s228, 4
        %s232 = int_to_ptr.hbm [resolvable:$true] %s231
        %s233 = sshll.u32 %s229, 4
        %s234 = int_to_ptr.vmem [resolvable:$true] %s233
        %238 = dma.hbm_to_vmem [thread:$0]  %s232, 96, %s234, %s230, 128, 128, 1
        %s239 = sadd.s32 %s122, 7
        %s240 = sld [smem:[#allocation5 + %s239]]
        %s241 = sshrl.u32 %s240, 3
        %s242 = sand.u32 %s240, 7
        %s243 = smul.u32 %s241, 48
        %s244 = sadd.s32 %s242, %s243
        %s245 = scalar_lea.hbm %s1, %s244
        %s246 = scalar_lea.vmem [#allocation2], 7
        %s247 = scalar_lea.sflag [#allocation3], 7
        %s248 = sshll.u32 %s245, 4
        %s249 = int_to_ptr.hbm [resolvable:$true] %s248
        %s250 = sshll.u32 %s246, 4
        %s251 = int_to_ptr.vmem [resolvable:$true] %s250
        %255 = dma.hbm_to_vmem [thread:$0]  %s249, 96, %s251, %s247, 128, 128, 1
        %s256 = smul.u32 1, 6
        %s257 = sshll.u32 %s256, 4
        %258 = dma.done [#allocation3], %s257
        %s259 = sshll.u32 %s256, 4
        %260 = dma.done %s145, %s259
        %s261 = sshll.u32 %s256, 4
        %262 = dma.done %s162, %s261
        %s263 = sshll.u32 %s256, 4
        %264 = dma.done %s179, %s263
        %s265 = sshll.u32 %s256, 4
        %266 = dma.done %s196, %s265
        %s267 = sshll.u32 %s256, 4
        %268 = dma.done %s213, %s267
        %s269 = sshll.u32 %s256, 4
        %270 = dma.done %s230, %s269
        %s271 = sshll.u32 %s256, 4
        %272 = dma.done %s247, %s271
        %v273 = vld [vmem:[#allocation2] sm:$0xff]
        %v274 = vld [vmem:[#allocation2 + $0x8] sm:$0xff]
        %v275 = vld [vmem:[#allocation2 + $0x10] sm:$0xff]
        %v276 = vld [vmem:[#allocation2 + $0x18] sm:$0xff]
        %v277 = vld [vmem:[#allocation2 + $0x20] sm:$0xff]
        %v278 = vld [vmem:[#allocation2 + $0x28] sm:$0xff]
        %v279 = vld [vmem:[#allocation6] sm:$0xff]
        %v280 = vld [vmem:[#allocation6 + $0x8] sm:$0xff]
        %v281 = vld [vmem:[#allocation6 + $0x10] sm:$0xff]
        %v282 = vld [vmem:[#allocation6 + $0x18] sm:$0xff]
        %v283 = vld [vmem:[#allocation6 + $0x20] sm:$0xff]
        %v284 = vld [vmem:[#allocation6 + $0x28] sm:$0xff]
        %v285 = vadd.f32 %v273, %v279
        %v286 = vadd.f32 %v274, %v280
        %v287 = vadd.f32 %v275, %v281
        %v288 = vadd.f32 %v276, %v282
        %v289 = vadd.f32 %v277, %v283
        %v290 = vadd.f32 %v278, %v284
        %291 = vst [vmem:[%s121] sm:$0xff] %v285
        %292 = vst [vmem:[%s121 + $0x8] sm:$0xff] %v286
        %293 = vst [vmem:[%s121 + $0x10] sm:$0xff] %v287
        %294 = vst [vmem:[%s121 + $0x18] sm:$0xff] %v288
        %295 = vst [vmem:[%s121 + $0x20] sm:$0xff] %v289
        %296 = vst [vmem:[%s121 + $0x28] sm:$0xff] %v290
        %s297 = sand.u32 %s55, 1
        %s298 = scalar_lea.sflag [#allocation8], %s297
        %s299 = sand.u32 %s55, 1
        %s300 = smul.addr %s299, 48
        %s301 = scalar_lea.vmem [#allocation9], %s300
        // Predicated region
        $region29: #{tpu_custom_call.1} parent=23 // pred_check
          %p302 = pneg %p65
        $region30: #{tpu_custom_call.1} parent=23 // pred_check_branch
          %304 = sbr.rel (%p302) target = $region32
        $region31: #{tpu_custom_call.1} parent=23 // pred_region
          %306 = vsyncadd %s298, 0
          %s307 = smul.addr %s26, 6
          %s308 = smul.addr %s307, 8
          %s309 = scalar_lea.hbm %s3, %s308
          %s311 = sshll.u32 %s301, 4
          %s312 = int_to_ptr.vmem [resolvable:$true] %s311
          %s313 = sshll.u32 %s309, 4
          %s314 = int_to_ptr.hbm [resolvable:$true] %s313
          %316 = dma.vmem_to_hbm [thread:$0]  %s312, 768, %s314, %s298
        $region32: #{tpu_custom_call.1} parent=23 // pred_fallthru
          _
      $region24: #{tpu_custom_call.1} parent=5 // pred_fallthru
        _
      %p317 = scmp.le.s32.totalorder 2, %s21
      // Predicated region
      $region33: #{tpu_custom_call.1} parent=5 // pred_check
        %p318 = pneg %p317
      $region34: #{tpu_custom_call.1} parent=5 // pred_check_branch
        %320 = sbr.rel (%p318) target = $region36
      $region35: #{tpu_custom_call.1} parent=5 // pred_region
        %s321 = ssub.s32 %s21, 2
        // Predicated region
        $region37: #{tpu_custom_call.1} parent=35 // pred_check
          %p322 = pneg %p71
        $region38: #{tpu_custom_call.1} parent=35 // pred_check_branch
          %324 = sbr.rel (%p322) target = $region40
        $region39: #{tpu_custom_call.1} parent=35 // pred_region
          %s325 = sand.u32 %s56, 1
          %s326 = scalar_lea.sflag [#allocation8], %s325
          %s327 = sand.u32 %s56, 1
          %s328 = smul.addr %s327, 48
          %s329 = scalar_lea.vmem [#allocation9], %s328
          %331 = dma.done %s326, 768
        $region40: #{tpu_custom_call.1} parent=35 // pred_fallthru
          _
      $region36: #{tpu_custom_call.1} parent=5 // pred_fallthru
        _
    $region6: #{tpu_custom_call.1} parent=1 // loop_footer
      %s25 = sadd.s32 1, %s21
    $region7: #{tpu_custom_call.1} parent=1 // loop_footer_branch
      %20 = sbr.rel target = $region3
    $region8: #{tpu_custom_call.1} parent=1 // loop_exit
      _
    %332 = vsyncpa [#allocation7], 1
    %s333 = scalar_lea.sflag [#allocation7], 1
    %334 = vsyncpa %s333, 1
    %335 = vsyncpa [#allocation8], 1
    %s336 = scalar_lea.sflag [#allocation8], 1
    %337 = vsyncpa %s336, 1
  %338 = vsyncmov [#allocation3]
  %s339 = vpop.sfrf %338
  %p340 = scmp.eq.s32.totalorder %s339, 0
  %p341 = pneg %p340
  %343 = shalt.err (%p341)
  %s344 = scalar_lea.sflag [#allocation3], 1
  %345 = vsyncmov %s344
  %s346 = vpop.sfrf %345
  %p347 = scmp.eq.s32.totalorder %s346, 0
  %p348 = pneg %p347
  %350 = shalt.err (%p348)
  %s351 = scalar_lea.sflag [#allocation3], 2
  %352 = vsyncmov %s351
  %s353 = vpop.sfrf %352
  %p354 = scmp.eq.s32.totalorder %s353, 0
  %p355 = pneg %p354
  %357 = shalt.err (%p355)
  %s358 = scalar_lea.sflag [#allocation3], 3
  %359 = vsyncmov %s358
  %s360 = vpop.sfrf %359
  %p361 = scmp.eq.s32.totalorder %s360, 0
  %p362 = pneg %p361
  %364 = shalt.err (%p362)
  %s365 = scalar_lea.sflag [#allocation3], 4
  %366 = vsyncmov %s365
  %s367 = vpop.sfrf %366
  %p368 = scmp.eq.s32.totalorder %s367, 0
  %p369 = pneg %p368
  %371 = shalt.err (%p369)
  %s372 = scalar_lea.sflag [#allocation3], 5
  %373 = vsyncmov %s372
  %s374 = vpop.sfrf %373
  %p375 = scmp.eq.s32.totalorder %s374, 0
  %p376 = pneg %p375
  %378 = shalt.err (%p376)
  %s379 = scalar_lea.sflag [#allocation3], 6
  %380 = vsyncmov %s379
  %s381 = vpop.sfrf %380
  %p382 = scmp.eq.s32.totalorder %s381, 0
  %p383 = pneg %p382
  %385 = shalt.err (%p383)
  %s386 = scalar_lea.sflag [#allocation3], 7
  %387 = vsyncmov %s386
  %s388 = vpop.sfrf %387
  %p389 = scmp.eq.s32.totalorder %s388, 0
  %p390 = pneg %p389
  %392 = shalt.err (%p390)

</llo_original>
